<compile_context>
chip_gen: v5e
topology: v5e:2x2
jax: 0.10.0
libtpu: 0.0.40
codegen_flags: <defaults>
</compile_context>

<pallas_src>
import functools

import jax
import jax.numpy as jnp
import numpy as np
from jax import lax
from jax.experimental import pallas as pl
from jax.experimental.pallas import tpu as pltpu


# ---------------------------------------------------------------------------
# Kernels
# ---------------------------------------------------------------------------
def _dilate_kernel_fused(x_ref, w_ref, b_ref, o_ref, *, d, tile_h):
    """One grid step = (batch n, row-tile t).

    x_ref: (Hp, W*Cin)        H-padded, row-flattened image of batch n (resident per n)
    w_ref: (3*W*Cin, W*Cout)  kh-concatenated banded weights (constant)
    b_ref: (1, W*Cout)        lane-flattened bias (constant)
    o_ref: (tile_h, W*Cout)   lane-dense output row tile (unmasked full-lane store)
    """
    t = pl.program_id(1)
    row0 = pl.multiple_of(t * tile_h, tile_h)
    # One halo'd load per tile (instead of 3 overlapping d-offset loads).
    win = x_ref[pl.ds(row0, tile_h + 2 * d), :]                     # (tile_h+2d, W*Cin)
    # Fold the 3 kh taps into a single K = 3*W*Cin matmul: one MXU weight load
    # per tile.  The concat is a small contiguous VMEM shuffle riding in slack slots.
    lhs = jnp.concatenate(
        [win[kh * d: kh * d + tile_h, :] for kh in range(3)], axis=1)  # (tile_h, 3*W*Cin)
    acc = jnp.dot(lhs, w_ref[...], preferred_element_type=jnp.float32)
    o_ref[...] = (acc + b_ref[...]).astype(o_ref.dtype)


def _dilate_kernel_per_tap(x_ref, w_ref, b_ref, o_ref, *, d, tile_h):
    """Fallback kernel: 3 separate K = W*Cin matmuls (w_ref: (3, W*Cin, W*Cout))."""
    t = pl.program_id(1)
    row0 = pl.multiple_of(t * tile_h, tile_h)
    win = x_ref[pl.ds(row0, tile_h + 2 * d), :]                     # single halo'd load
    acc = jnp.dot(win[0:tile_h, :], w_ref[0], preferred_element_type=jnp.float32)
    for kh in (1, 2):
        acc = acc + jnp.dot(win[kh * d: kh * d + tile_h, :], w_ref[kh],
                            preferred_element_type=jnp.float32)
    o_ref[...] = (acc + b_ref[...]).astype(o_ref.dtype)


# ---------------------------------------------------------------------------
# One-time parameter preparation (hoisted out of the forward path)
# ---------------------------------------------------------------------------
def prepare_dilate_conv_params(weight, bias, d_rate, W, dtype=jnp.float32):
    """Precompute banded weights + lane-flattened bias ONCE (at init / weight update).

    band3[kh, wi*Cin+ci, wo*Cout+co] = weight[co, ci, kh, kw]  iff  wi == wo + (kw-1)*d
    (out-of-range kw taps vanish -> implicit zero padding along W, exact 0/1 masking).
    """
    Cout, Cin, KH, KW = weight.shape
    assert KH == 3 and KW == 3, "DilateConv uses a fixed 3x3 kernel"
    d = int(d_rate)
    WCin, WCout = W * Cin, W * Cout

    w_kwh = jnp.transpose(jnp.asarray(weight, dtype), (3, 2, 1, 0))   # (kw, kh, Cin, Cout)
    wi = jnp.arange(W)[None, :, None]                                 # input column
    wo = jnp.arange(W)[None, None, :]                                 # output column
    kw_off = ((jnp.arange(3) - 1) * d)[:, None, None]
    sel = (wi == wo + kw_off).astype(dtype)                           # (kw, W_in, W_out)
    band3 = (sel[:, None, :, None, :, None] *
             w_kwh[:, :, None, :, None, :]).sum(axis=0)               # (kh, W_in, Cin, W_out, Cout)
    band3 = band3.reshape(3, WCin, WCout)

    bias_row = jnp.tile(jnp.asarray(bias, dtype), W).reshape(1, WCout)
    return band3, bias_row


# ---------------------------------------------------------------------------
# Forward
# ---------------------------------------------------------------------------
def _pick_tile_h(H, N, dtype):
    """Largest legal row tile (cap 128: (128, W*Cout) f32 acc = a few vregs)."""
    itemsize = jnp.dtype(dtype).itemsize
    sub = 8 * max(1, 4 // itemsize)          # sublane multiple: 8 f32, 16 bf16, 32 int8
    cap = 128
    if H <= cap:
        tile_h = H                           # full-H block is always legal
    else:
        tile_h = H
        for cand in range(cap, sub - 1, -sub):
            if H % cand == 0:
                tile_h = cand
                break
    # Megacore (v7x 2 TCs): keep >= 2 independent grid steps when N == 1.
    if N == 1 and tile_h == H and H % 2 == 0 and (H // 2) % sub == 0:
        tile_h = H // 2
    return tile_h


def dilate_conv_rows(x_rows, band3, bias_row, *, d_rate, tile_h=None, fuse_taps=True):
    """Core forward on the lane-dense row-flattened layout.

    x_rows  : (N, H, W*Cin)  -> returns (N, H, W*Cout).
    Use this end-to-end when the surrounding model can carry (N, H, W*C); it skips
    the NCHW <-> NHWC HBM passes entirely.
    """
    N, H, WCin = x_rows.shape
    WCout = bias_row.shape[-1]
    d = int(d_rate)
    Hp = H + 2 * d
    dtype = x_rows.dtype

    if tile_h is None:
        tile_h = _pick_tile_h(H, N, dtype)
    assert H % tile_h == 0, "tile_h must divide H"
    num_t = H // tile_h

    # Only input-side layout op kept: the d-row H halo (W-boundary zeros are baked
    # into the banded weights, so W is never padded).
    xp = jnp.pad(x_rows, ((0, 0), (d, d), (0, 0)))                    # (N, Hp, W*Cin)

    if fuse_taps:
        kernel = functools.partial(_dilate_kernel_fused, d=d, tile_h=tile_h)
        band = band3.reshape(3 * WCin, WCout)                         # free, contiguous
        w_spec = pl.BlockSpec((3 * WCin, WCout), lambda n, t: (0, 0))
    else:
        kernel = functools.partial(_dilate_kernel_per_tap, d=d, tile_h=tile_h)
        band = band3
        w_spec = pl.BlockSpec((3, WCin, WCout), lambda n, t: (0, 0, 0))

    return pl.pallas_call(
        kernel,
        out_shape=jax.ShapeDtypeStruct((N, H, WCout), dtype),
        grid_spec=pltpu.PrefetchScalarGridSpec(
            num_scalar_prefetch=0,
            grid=(N, num_t),
            in_specs=[
                # Full padded image for batch n (constant in t -> resident per n).
                # TODO(synk): for large H*W*Cin switch to a halo'd per-tile window
                # (pl.Element on H or a manual make_async_copy) to bound VMEM and
                # overlap the per-n DMA with the first tile's compute.
                pl.BlockSpec((None, Hp, WCin), lambda n, t: (n, 0, 0)),
                # Constant operands (weights / bias): constant index map -> fetched once.
                # TODO(synk): pipeline_mode=pl.Buffered(1) here on v7x to halve their
                # resident footprint once larger W/Cin/Cout configs are exercised.
                w_spec,
                pl.BlockSpec((1, WCout), lambda n, t: (0, 0)),
            ],
            out_specs=pl.BlockSpec((None, tile_h, WCout), lambda n, t: (n, t, 0)),
        ),
        compiler_params=pltpu.CompilerParams(
            dimension_semantics=("parallel", "parallel"),   # independent axes; 2-TC friendly
            vmem_limit_bytes=32 * 1024 * 1024,
        ),
    )(xp, band, bias_row)


def dilate_conv_nchw(x_nchw, band3, bias_row, *, d_rate, tile_h=None, fuse_taps=True):
    """Drop-in NCHW forward matching nn.Conv2d(in, out, 3, stride=1, padding=d, dilation=d).

    Keeps only the unavoidable boundary layout conversions; prefer `dilate_conv_rows`
    end-to-end to skip them.
    """
    N, Cin, H, W = x_nchw.shape
    WCout = bias_row.shape[-1]
    Cout = WCout // W
    x_rows = jnp.transpose(x_nchw, (0, 2, 3, 1)).reshape(N, H, W * Cin)
    out_rows = dilate_conv_rows(x_rows, band3, bias_row, d_rate=d_rate,
                                tile_h=tile_h, fuse_taps=fuse_taps)
    return jnp.transpose(out_rows.reshape(N, H, W, Cout), (0, 3, 1, 2))


def _reference_conv(x_nchw, weight, bias, d_rate):
    """Plain-JAX reference (same semantics as nn.Conv2d with dilation)."""
    out = lax.conv_general_dilated(
        x_nchw, weight,
        window_strides=(1, 1),
        padding=((d_rate, d_rate), (d_rate, d_rate)),
        rhs_dilation=(d_rate, d_rate),
        dimension_numbers=("NCHW", "OIHW", "NCHW"),
    )
    return out + bias.reshape(1, -1, 1, 1)


if __name__ == "__main__":
    # DilateConv(d_rate=2, in_ch=4, out_ch=8) on a small deterministic example.
    d_rate, in_ch, out_ch = 2, 4, 8
    N, H, W = 2, 16, 16

    key = jax.random.PRNGKey(0)
    kx, kw, kb = jax.random.split(key, 3)

    x = jax.random.normal(kx, (N, in_ch, H, W), dtype=jnp.float32)

    # Deterministic parameter init mimicking PyTorch Conv2d default (uniform in [-k, k]).
    fan_in = in_ch * 3 * 3
    k = 1.0 / np.sqrt(fan_in)
    weight = jax.random.uniform(kw, (out_ch, in_ch, 3, 3), jnp.float32, -k, k)
    bias = jax.random.uniform(kb, (out_ch,), jnp.float32, -k, k)

    # Banded weights / bias are built ONCE, outside the jitted forward.
    band3, bias_row = prepare_dilate_conv_params(weight, bias, d_rate, W)
    band3 = jax.block_until_ready(band3)
    bias_row = jax.block_until_ready(bias_row)

    fwd_fused = jax.jit(functools.partial(dilate_conv_nchw, d_rate=d_rate, fuse_taps=True))
    fwd_per_tap = jax.jit(functools.partial(dilate_conv_nchw, d_rate=d_rate, fuse_taps=False))

    try:
        # Preferred path: single fused K=3*W*Cin matmul per row tile, grid=(N, 1).
        out = jax.block_until_ready(fwd_fused(x, band3, bias_row))
    except Exception:
        # Fallback for Mosaic builds without lane-dim concatenate support:
        # same tiling, three K=W*Cin matmuls per tile.
        out = jax.block_until_ready(fwd_per_tap(x, band3, bias_row))

    ref = jax.block_until_ready(_reference_conv(x, weight, bias, d_rate))
    np.testing.assert_allclose(np.asarray(out), np.asarray(ref), rtol=1e-5, atol=1e-5)

    assert out.shape == (N, out_ch, H, W)
    print("KERNEL_OK")
</pallas_src>

<mosaic_0001>
module attributes {stable_mosaic.version = 11 : i64} {
  func.func @_dilate_kernel_fused(%arg0: i32, %arg1: i32, %arg2: memref<1x20x64xf32, #tpu.memory_space<vmem>>, %arg3: memref<192x128xf32, #tpu.memory_space<vmem>>, %arg4: memref<1x128xf32, #tpu.memory_space<vmem>>, %arg5: memref<1x16x128xf32, #tpu.memory_space<vmem>>) attributes {dimension_semantics = [#tpu.dimension_semantics<parallel>, #tpu.dimension_semantics<parallel>], iteration_bounds = array<i64: 2, 1>, scalar_prefetch = 0 : i64, scratch_operands = 0 : i64, tpu.core_type = #tpu.core_type<tc>, window_params = [{transform_indices = @transform_0, window_bounds = array<i64: 1, 20, 64>}, {pipeline_mode = #tpu.pipeline_mode<synchronous>, transform_indices = @transform_1, window_bounds = array<i64: 192, 128>}, {pipeline_mode = #tpu.pipeline_mode<synchronous>, transform_indices = @transform_2, window_bounds = array<i64: 1, 128>}, {transform_indices = @transform_3, window_bounds = array<i64: 1, 16, 128>}]} {
    %c16_i32 = arith.constant 16 : i32
    %0 = arith.muli %arg1, %c16_i32 : i32
    %1 = tpu.assume_multiple %0, 16 : i32
    %c0 = arith.constant 0 : index
    %2 = arith.index_cast %1 : i32 to index
    %c0_0 = arith.constant 0 : index
    %3 = vector.load %arg2[%c0, %2, %c0_0] : memref<1x20x64xf32, #tpu.memory_space<vmem>>, vector<1x20x64xf32>
    %4 = vector.shape_cast %3 : vector<1x20x64xf32> to vector<20x64xf32>
    %5 = vector.extract_strided_slice %4 {offsets = [0, 0], sizes = [16, 64], strides = [1, 1]} : vector<20x64xf32> to vector<16x64xf32>
    %6 = vector.extract_strided_slice %4 {offsets = [2, 0], sizes = [16, 64], strides = [1, 1]} : vector<20x64xf32> to vector<16x64xf32>
    %7 = vector.extract_strided_slice %4 {offsets = [4, 0], sizes = [16, 64], strides = [1, 1]} : vector<20x64xf32> to vector<16x64xf32>
    %8 = tpu.concatenate %5, %6, %7 in 1 : vector<16x64xf32>, vector<16x64xf32>, vector<16x64xf32> -> vector<16x192xf32>
    %c0_1 = arith.constant 0 : index
    %c0_2 = arith.constant 0 : index
    %9 = vector.load %arg3[%c0_1, %c0_2] : memref<192x128xf32, #tpu.memory_space<vmem>>, vector<192x128xf32>
    %cst = arith.constant dense<0.000000e+00> : vector<16x128xf32>
    %10 = tpu.matmul %8, %9, %cst {dimension_numbers = #tpu.dot_dimension_numbers<[1], [0], [0], [1], [0, 0, 1, 1], [], []>} : vector<16x192xf32>, vector<192x128xf32>, vector<16x128xf32> -> vector<16x128xf32>
    %c0_3 = arith.constant 0 : index
    %c0_4 = arith.constant 0 : index
    %11 = vector.load %arg4[%c0_3, %c0_4] : memref<1x128xf32, #tpu.memory_space<vmem>>, vector<1x128xf32>
    %12 = vector.broadcast %11 : vector<1x128xf32> to vector<16x128xf32>
    %13 = arith.addf %10, %12 : vector<16x128xf32>
    %c0_5 = arith.constant 0 : index
    %c0_6 = arith.constant 0 : index
    %c0_7 = arith.constant 0 : index
    %14 = vector.load %arg5[%c0_5, %c0_6, %c0_7] : memref<1x16x128xf32, #tpu.memory_space<vmem>>, vector<1x16x128xf32>
    %15 = vector.shape_cast %14 : vector<1x16x128xf32> to vector<16x128xf32>
    %16 = vector.shape_cast %13 : vector<16x128xf32> to vector<1x16x128xf32>
    tpu.vector_store %arg5[%c0_5, %c0_6, %c0_7], %16 {strides = array<i32>} : memref<1x16x128xf32, #tpu.memory_space<vmem>>, vector<1x16x128xf32>,
    return
  }
  func.func @transform_0(%arg0: i32, %arg1: i32) -> (i32, i32, i32) {
    %c0_i32 = arith.constant 0 : i32
    %c0_i32_0 = arith.constant 0 : i32
    %c0_i32_1 = arith.constant 0 : i32
    return %arg0, %c0_i32, %c0_i32_0 : i32, i32, i32
  }
  func.func @transform_1(%arg0: i32, %arg1: i32) -> (i32, i32) {
    %c0_i32 = arith.constant 0 : i32
    %c0_i32_0 = arith.constant 0 : i32
    %c0_i32_1 = arith.constant 0 : i32
    return %c0_i32, %c0_i32_0 : i32, i32
  }
  func.func @transform_2(%arg0: i32, %arg1: i32) -> (i32, i32) {
    %c0_i32 = arith.constant 0 : i32
    %c0_i32_0 = arith.constant 0 : i32
    %c0_i32_1 = arith.constant 0 : i32
    return %c0_i32, %c0_i32_0 : i32, i32
  }
  func.func @transform_3(%arg0: i32, %arg1: i32) -> (i32, i32, i32) {
    %c0_i32 = arith.constant 0 : i32
    %c0_i32_0 = arith.constant 0 : i32
    return %arg0, %arg1, %c0_i32 : i32, i32, i32
  }
}

module attributes {stable_mosaic.version = 11 : i64} {
  func.func @_dilate_kernel_per_tap(%arg0: i32, %arg1: i32, %arg2: memref<1x20x64xf32, #tpu.memory_space<vmem>>, %arg3: memref<3x64x128xf32, #tpu.memory_space<vmem>>, %arg4: memref<1x128xf32, #tpu.memory_space<vmem>>, %arg5: memref<1x16x128xf32, #tpu.memory_space<vmem>>) attributes {dimension_semantics = [#tpu.dimension_semantics<parallel>, #tpu.dimension_semantics<parallel>], iteration_bounds = array<i64: 2, 1>, scalar_prefetch = 0 : i64, scratch_operands = 0 : i64, tpu.core_type = #tpu.core_type<tc>, window_params = [{transform_indices = @transform_0, window_bounds = array<i64: 1, 20, 64>}, {pipeline_mode = #tpu.pipeline_mode<synchronous>, transform_indices = @transform_1, window_bounds = array<i64: 3, 64, 128>}, {pipeline_mode = #tpu.pipeline_mode<synchronous>, transform_indices = @transform_2, window_bounds = array<i64: 1, 128>}, {transform_indices = @transform_3, window_bounds = array<i64: 1, 16, 128>}]} {
    %c16_i32 = arith.constant 16 : i32
    %0 = arith.muli %arg1, %c16_i32 : i32
    %1 = tpu.assume_multiple %0, 16 : i32
    %c0 = arith.constant 0 : index
    %2 = arith.index_cast %1 : i32 to index
    %c0_0 = arith.constant 0 : index
    %3 = vector.load %arg2[%c0, %2, %c0_0] : memref<1x20x64xf32, #tpu.memory_space<vmem>>, vector<1x20x64xf32>
    %4 = vector.shape_cast %3 : vector<1x20x64xf32> to vector<20x64xf32>
    %5 = vector.extract_strided_slice %4 {offsets = [0, 0], sizes = [16, 64], strides = [1, 1]} : vector<20x64xf32> to vector<16x64xf32>
    %c0_1 = arith.constant 0 : index
    %c0_2 = arith.constant 0 : index
    %c0_3 = arith.constant 0 : index
    %6 = vector.load %arg3[%c0_1, %c0_2, %c0_3] : memref<3x64x128xf32, #tpu.memory_space<vmem>>, vector<1x64x128xf32>
    %7 = vector.shape_cast %6 : vector<1x64x128xf32> to vector<64x128xf32>
    %cst = arith.constant dense<0.000000e+00> : vector<16x128xf32>
    %8 = tpu.matmul %5, %7, %cst {dimension_numbers = #tpu.dot_dimension_numbers<[1], [0], [0], [1], [0, 0, 1, 1], [], []>} : vector<16x64xf32>, vector<64x128xf32>, vector<16x128xf32> -> vector<16x128xf32>
    %9 = vector.extract_strided_slice %4 {offsets = [2, 0], sizes = [16, 64], strides = [1, 1]} : vector<20x64xf32> to vector<16x64xf32>
    %c1 = arith.constant 1 : index
    %c0_4 = arith.constant 0 : index
    %c0_5 = arith.constant 0 : index
    %10 = vector.load %arg3[%c1, %c0_4, %c0_5] : memref<3x64x128xf32, #tpu.memory_space<vmem>>, vector<1x64x128xf32>
    %11 = vector.shape_cast %10 : vector<1x64x128xf32> to vector<64x128xf32>
    %cst_6 = arith.constant dense<0.000000e+00> : vector<16x128xf32>
    %12 = tpu.matmul %9, %11, %cst_6 {dimension_numbers = #tpu.dot_dimension_numbers<[1], [0], [0], [1], [0, 0, 1, 1], [], []>} : vector<16x64xf32>, vector<64x128xf32>, vector<16x128xf32> -> vector<16x128xf32>
    %13 = arith.addf %8, %12 : vector<16x128xf32>
    %14 = vector.extract_strided_slice %4 {offsets = [4, 0], sizes = [16, 64], strides = [1, 1]} : vector<20x64xf32> to vector<16x64xf32>
    %c2 = arith.constant 2 : index
    %c0_7 = arith.constant 0 : index
    %c0_8 = arith.constant 0 : index
    %15 = vector.load %arg3[%c2, %c0_7, %c0_8] : memref<3x64x128xf32, #tpu.memory_space<vmem>>, vector<1x64x128xf32>
    %16 = vector.shape_cast %15 : vector<1x64x128xf32> to vector<64x128xf32>
    %cst_9 = arith.constant dense<0.000000e+00> : vector<16x128xf32>
    %17 = tpu.matmul %14, %16, %cst_9 {dimension_numbers = #tpu.dot_dimension_numbers<[1], [0], [0], [1], [0, 0, 1, 1], [], []>} : vector<16x64xf32>, vector<64x128xf32>, vector<16x128xf32> -> vector<16x128xf32>
    %18 = arith.addf %13, %17 : vector<16x128xf32>
    %c0_10 = arith.constant 0 : index
    %c0_11 = arith.constant 0 : index
    %19 = vector.load %arg4[%c0_10, %c0_11] : memref<1x128xf32, #tpu.memory_space<vmem>>, vector<1x128xf32>
    %20 = vector.broadcast %19 : vector<1x128xf32> to vector<16x128xf32>
    %21 = arith.addf %18, %20 : vector<16x128xf32>
    %c0_12 = arith.constant 0 : index
    %c0_13 = arith.constant 0 : index
    %c0_14 = arith.constant 0 : index
    %22 = vector.load %arg5[%c0_12, %c0_13, %c0_14] : memref<1x16x128xf32, #tpu.memory_space<vmem>>, vector<1x16x128xf32>
    %23 = vector.shape_cast %22 : vector<1x16x128xf32> to vector<16x128xf32>
    %24 = vector.shape_cast %21 : vector<16x128xf32> to vector<1x16x128xf32>
    tpu.vector_store %arg5[%c0_12, %c0_13, %c0_14], %24 {strides = array<i32>} : memref<1x16x128xf32, #tpu.memory_space<vmem>>, vector<1x16x128xf32>,
    return
  }
  func.func @transform_0(%arg0: i32, %arg1: i32) -> (i32, i32, i32) {
    %c0_i32 = arith.constant 0 : i32
    %c0_i32_0 = arith.constant 0 : i32
    %c0_i32_1 = arith.constant 0 : i32
    return %arg0, %c0_i32, %c0_i32_0 : i32, i32, i32
  }
  func.func @transform_1(%arg0: i32, %arg1: i32) -> (i32, i32, i32) {
    %c0_i32 = arith.constant 0 : i32
    %c0_i32_0 = arith.constant 0 : i32
    %c0_i32_1 = arith.constant 0 : i32
    %c0_i32_2 = arith.constant 0 : i32
    return %c0_i32, %c0_i32_0, %c0_i32_1 : i32, i32, i32
  }
  func.func @transform_2(%arg0: i32, %arg1: i32) -> (i32, i32) {
    %c0_i32 = arith.constant 0 : i32
    %c0_i32_0 = arith.constant 0 : i32
    %c0_i32_1 = arith.constant 0 : i32
    return %c0_i32, %c0_i32_0 : i32, i32
  }
  func.func @transform_3(%arg0: i32, %arg1: i32) -> (i32, i32, i32) {
    %c0_i32 = arith.constant 0 : i32
    %c0_i32_0 = arith.constant 0 : i32
    return %arg0, %arg1, %c0_i32 : i32, i32, i32
  }
}

</mosaic_0001>

<llo_original>
// kernel: dilate_conv_nchw.1
$region0: #{dilate_conv_nchw.1}
  #allocation0 [shape = 'u32[]', space=smem, size = 0x4, offset = 0x4, fixed_abs, tag = 'smem constant byte address 0x4 - core index']
  #allocation1 [shape = 'u32[72,128]{1,0:T(1,128)}', space=vmem, size = 0x9000, scoped, tag = 'internal scratch']
  %s0 = inlined_call_operand.vmem [shape: f32[2,20,64], index: 0, kind: input, shape index: {}]
  %s1 = inlined_call_operand.vmem [shape: f32[192,128], index: 1, kind: input, shape index: {}]
  %s2 = inlined_call_operand.vmem [shape: f32[1,128], index: 2, kind: input, shape index: {}]
  %s3 = inlined_call_operand.vmem [shape: f32[2,16,128], index: 3, kind: output, shape index: {}]
  %s4 = sld [smem:[#allocation0]]
  $region45: #{dilate_conv_nchw.1} parent=0
    _
  %s6 = ssub.s32 1, %s4
  %s7 = scalar_select 0, %s6, %s4
  loop: start=0, step=1, limit=4
  $region2: #{dilate_conv_nchw.1} parent=0 // loop_pre_header
    _
  $region3: #{dilate_conv_nchw.1} parent=0 // loop_header
    %s9 = sphi 0, %s13
    %p10 = scmp.ge.s32.totalorder %s9, 4
    %s16 = sphi 0, %s28
    %s17 = sphi 0, %s24
    %s18 = sphi 0, %s16
    %s19 = sphi 0, %s17
    %s20 = sphi 0, %s18
    %s21 = sphi 0, %s19
    %s31 = sphi 0, %s33
    %s34 = sphi 0, %s31
    %s35 = sphi 0, %s34
    %s51 = sphi 0, %s35
    %s55 = sphi 0, %s55
    %s57 = sphi 0, %s55
    %s58 = sphi 0, %s57
    %s72 = sphi 0, %s58
    %s76 = sphi 0, %s76
    %s78 = sphi 0, %s76
    %s79 = sphi 0, %s78
    %s93 = sphi 0, %s79
    %s101 = sphi 0, %s103
    %s104 = sphi 0, %s101
    %s105 = sphi 0, %s104
    %s121 = sphi 0, %s105
  $region4: #{dilate_conv_nchw.1} parent=0 // loop_header_branch
    %12 = sbr.rel (%p10) target = $region8
  $region5: #{dilate_conv_nchw.1} parent=0 // loop_body
    %s14 = ssub.s32 %s9, 1
    %s15 = ssub.s32 %s9, 2
    %s22 = sadd.s32 1, %s17
    %p23 = scmp.ge.s32.totalorder %s22, 1
    %s24 = scalar_select %p23, 0, %s22
    %s25 = sadd.s32 1, %s16
    %s26 = scalar_select %p23, %s25, %s16
    %p27 = scmp.ge.s32.totalorder %s26, 2
    %s28 = scalar_select %p27, 0, %s26
    %s29 = ssub.s32 %s16, %s28
    %p30 = scmp.eq.s32.totalorder %s29, 0
    %s32 = sadd.s32 %s31, 1
    %s33 = scalar_select %p30, %s31, %s32
    %p36 = pneg %p30
    %p37 = scmp.eq.s32.totalorder %s9, 1
    %p38 = por %p36, %p37
    %p39 = scmp.ne.s32.totalorder %s31, %s34
    %p40 = scmp.eq.s32.totalorder %s9, 0
    %p41 = por %p39, %p40
    %p42 = scmp.ne.s32.totalorder %s31, %s34
    %p43 = scmp.eq.s32.totalorder %s14, 1
    %p44 = por %p42, %p43
    %p45 = scmp.ne.s32.totalorder %s34, %s35
    %p46 = scmp.eq.s32.totalorder %s14, 0
    %p47 = por %p45, %p46
    %p48 = scmp.ne.s32.totalorder %s34, %s35
    %p49 = scmp.eq.s32.totalorder %s15, 1
    %p50 = por %p48, %p49
    %p52 = scmp.ne.s32.totalorder %s35, %s51
    %p53 = scmp.eq.s32.totalorder %s15, 0
    %p54 = por %p52, %p53
    %s56 = sadd.s32 %s55, 1
    %p59 = scmp.eq.s32.totalorder %s9, 1
    %p60 = scmp.ne.s32.totalorder %s55, %s57
    %p61 = scmp.eq.s32.totalorder %s9, 0
    %p62 = por %p60, %p61
    %p63 = scmp.ne.s32.totalorder %s55, %s57
    %p64 = scmp.eq.s32.totalorder %s14, 1
    %p65 = por %p63, %p64
    %p66 = scmp.ne.s32.totalorder %s57, %s58
    %p67 = scmp.eq.s32.totalorder %s14, 0
    %p68 = por %p66, %p67
    %p69 = scmp.ne.s32.totalorder %s57, %s58
    %p70 = scmp.eq.s32.totalorder %s15, 1
    %p71 = por %p69, %p70
    %p73 = scmp.ne.s32.totalorder %s58, %s72
    %p74 = scmp.eq.s32.totalorder %s15, 0
    %p75 = por %p73, %p74
    %s77 = sadd.s32 %s76, 1
    %p80 = scmp.eq.s32.totalorder %s9, 1
    %p81 = scmp.ne.s32.totalorder %s76, %s78
    %p82 = scmp.eq.s32.totalorder %s9, 0
    %p83 = por %p81, %p82
    %p84 = scmp.ne.s32.totalorder %s76, %s78
    %p85 = scmp.eq.s32.totalorder %s14, 1
    %p86 = por %p84, %p85
    %p87 = scmp.ne.s32.totalorder %s78, %s79
    %p88 = scmp.eq.s32.totalorder %s14, 0
    %p89 = por %p87, %p88
    %p90 = scmp.ne.s32.totalorder %s78, %s79
    %p91 = scmp.eq.s32.totalorder %s15, 1
    %p92 = por %p90, %p91
    %p94 = scmp.ne.s32.totalorder %s79, %s93
    %p95 = scmp.eq.s32.totalorder %s15, 0
    %p96 = por %p94, %p95
    %s97 = ssub.s32 %s16, %s28
    %s98 = ssub.s32 %s17, %s24
    %s99 = sor.u32 %s97, %s98
    %p100 = scmp.eq.s32.totalorder %s99, 0
    %s102 = sadd.s32 %s101, 1
    %s103 = scalar_select %p100, %s101, %s102
    %p106 = pneg %p100
    %p107 = scmp.eq.s32.totalorder %s9, 1
    %p108 = por %p106, %p107
    %p109 = scmp.ne.s32.totalorder %s101, %s104
    %p110 = scmp.eq.s32.totalorder %s9, 0
    %p111 = por %p109, %p110
    %p112 = scmp.ne.s32.totalorder %s101, %s104
    %p113 = scmp.eq.s32.totalorder %s14, 1
    %p114 = por %p112, %p113
    %p115 = scmp.ne.s32.totalorder %s104, %s105
    %p116 = scmp.eq.s32.totalorder %s14, 0
    %p117 = por %p115, %p116
    %p118 = scmp.ne.s32.totalorder %s104, %s105
    %p119 = scmp.eq.s32.totalorder %s15, 1
    %p120 = por %p118, %p119
    %p122 = scmp.ne.s32.totalorder %s105, %s121
    %p123 = scmp.eq.s32.totalorder %s15, 0
    %p124 = por %p122, %p123
    %p125 = scmp.le.s32.totalorder 1, %s9
    %p126 = scmp.lt.s32.totalorder %s9, 3
    %p127 = pnand %p125, %p126
    %p128 = pneg %p127
    // Predicated region
    $region9: #{dilate_conv_nchw.1} parent=5 // pred_check
      _
    $region10: #{dilate_conv_nchw.1} parent=5 // pred_check_branch
      %130 = sbr.rel (%p127) target = $region12
    $region11: #{dilate_conv_nchw.1} parent=5 // pred_region
      %s131 = ssub.s32 %s9, 1
      // Predicated region
      $region13: #{dilate_conv_nchw.1} parent=11 // pred_check
        %p132 = pneg %p68
      $region14: #{dilate_conv_nchw.1} parent=11 // pred_check_branch
        %134 = sbr.rel (%p132) target = $region16
      $region15: #{dilate_conv_nchw.1} parent=11 // pred_region
        _
      $region16: #{dilate_conv_nchw.1} parent=11 // pred_fallthru
        _
      // Predicated region
      $region17: #{dilate_conv_nchw.1} parent=11 // pred_check
        %p135 = pneg %p89
      $region18: #{dilate_conv_nchw.1} parent=11 // pred_check_branch
        %137 = sbr.rel (%p135) target = $region20
      $region19: #{dilate_conv_nchw.1} parent=11 // pred_region
        _
      $region20: #{dilate_conv_nchw.1} parent=11 // pred_fallthru
        _
    $region12: #{dilate_conv_nchw.1} parent=5 // pred_fallthru
      _
    %p138 = scmp.lt.s32.totalorder %s9, 2
    // Predicated region
    $region21: #{dilate_conv_nchw.1} parent=5 // pred_check
      %p139 = pneg %p138
    $region22: #{dilate_conv_nchw.1} parent=5 // pred_check_branch
      %141 = sbr.rel (%p139) target = $region24
    $region23: #{dilate_conv_nchw.1} parent=5 // pred_region
      // Predicated region
      $region25: #{dilate_conv_nchw.1} parent=23 // pred_check
        %p142 = pneg %p41
      $region26: #{dilate_conv_nchw.1} parent=23 // pred_check_branch
        %144 = sbr.rel (%p142) target = $region28
      $region27: #{dilate_conv_nchw.1} parent=23 // pred_region
        %p145 = scmp.lt.s32.totalorder %s16, 1
        %s146 = scalar_select %p145, %s16, 1
        %s147 = smul.addr %s146, 3
        %s148 = smul.addr %s147, 8
        %s149 = scalar_lea.vmem %s0, %s148
      $region28: #{dilate_conv_nchw.1} parent=23 // pred_fallthru
        _
    $region24: #{dilate_conv_nchw.1} parent=5 // pred_fallthru
      _
    %p150 = scmp.le.s32.totalorder 1, %s9
    %p151 = scmp.lt.s32.totalorder %s9, 3
    %p152 = pnand %p150, %p151
    %p153 = pneg %p152
    // Predicated region
    $region29: #{dilate_conv_nchw.1} parent=5 // pred_check
      _
    $region30: #{dilate_conv_nchw.1} parent=5 // pred_check_branch
      %155 = sbr.rel (%p152) target = $region32
    $region31: #{dilate_conv_nchw.1} parent=5 // pred_region
      %s156 = ssub.s32 %s9, 1
      %p157 = scmp.lt.s32.totalorder %s18, 1
      %s158 = scalar_select %p157, %s18, 1
      %s159 = smul.addr %s158, 3
      %s160 = smul.addr %s159, 8
      %s161 = scalar_lea.vmem %s0, %s160
      %p162 = pneg %p47
      %p163 = pneg %p44
      %p164 = pneg %p68
      %p165 = pneg %p65
      %p166 = pneg %p89
      %p167 = pneg %p86
      %p168 = pneg %p117
      %p169 = pneg %p114
      %s170 = smul.u32 2, %s19
      %p171 = scmp.lt.s32.totalorder %s18, 1
      %s172 = scalar_select %p171, %s18, 1
      %p173 = scmp.lt.s32.totalorder %s170, 1
      %s174 = scalar_select %p173, %s170, 1
      %s175 = smul.addr %s172, 2
      %s176 = sadd.s32 %s174, %s175
      %s177 = smul.addr %s176, 8
      %s178 = scalar_lea.vmem %s3, %s177
      %p179 = scmp.lt.s32.totalorder %s18, 1
      %s180 = scalar_select %p179, %s18, 1
      %s181 = smul.addr %s180, 3
      %s182 = smul.addr %s181, 8
      %s183 = scalar_lea.vmem %s0, %s182
      %s184 = smul.u32 2, %s19
      %p185 = scmp.lt.s32.totalorder %s18, 1
      %s186 = scalar_select %p185, %s18, 1
      %p187 = scmp.lt.s32.totalorder %s184, 1
      %s188 = scalar_select %p187, %s184, 1
      %s189 = smul.addr %s186, 2
      %s190 = sadd.s32 %s188, %s189
      %s191 = smul.addr %s190, 8
      %s192 = scalar_lea.vmem %s3, %s191
      %s193 = smul.u32 2, %s19
      %s194 = smul.u32 %s19, 16
      %s195 = scalar_lea.vmem %s183, %s194
      %v196 = vld [vmem:[%s195] sm:$0xff]
      %v197 = vld [vmem:[%s195 + $0x8] sm:$0xff]
      %v198 = vld [vmem:[%s195 + $0x10] sm:$0xf]
      %vm202 = vcmask 1045504
      %v203 = vrot.slane %v196, 2
      %v204 = vrot.slane %v197, 2
      %v205 = vsel %vm202, %v203, %v204
      %v206 = vrot.slane %v198, 2
      %v207 = vsel %vm202, %v204, %v206
      %208 = vrot.lane.b32.xlu0 %v205, 64
      %v209 = vpop.permute.xlu0 %208
      %210 = vrot.lane.b32.xlu0 %v207, 64
      %v211 = vpop.permute.xlu0 %210
      %vm214 = vcmask 1043456
      %v215 = vrot.slane %v196, 4
      %v216 = vrot.slane %v197, 4
      %v217 = vsel %vm214, %v215, %v216
      %v218 = vrot.slane %v198, 4
      %v219 = vsel %vm214, %v216, %v218
      %vm220 = vcmask 523264
      %v221 = vsel %vm220, %v196, %v209
      %v222 = vsel %vm220, %v197, %v211
      %v223 = vld [vmem:[%s1] sm:$0xff]
      %v224 = vld [vmem:[%s1 + $0x8] sm:$0xff]
      %v225 = vld [vmem:[%s1 + $0x10] sm:$0xff]
      %v226 = vld [vmem:[%s1 + $0x18] sm:$0xff]
      %v227 = vld [vmem:[%s1 + $0x20] sm:$0xff]
      %v228 = vld [vmem:[%s1 + $0x28] sm:$0xff]
      %v229 = vld [vmem:[%s1 + $0x30] sm:$0xff]
      %v230 = vld [vmem:[%s1 + $0x38] sm:$0xff]
      %v231 = vld [vmem:[%s1 + $0x40] sm:$0xff]
      %v232 = vld [vmem:[%s1 + $0x48] sm:$0xff]
      %v233 = vld [vmem:[%s1 + $0x50] sm:$0xff]
      %v234 = vld [vmem:[%s1 + $0x58] sm:$0xff]
      %v235 = vld [vmem:[%s1 + $0x60] sm:$0xff]
      %v236 = vld [vmem:[%s1 + $0x68] sm:$0xff]
      %v237 = vld [vmem:[%s1 + $0x70] sm:$0xff]
      %v238 = vld [vmem:[%s1 + $0x78] sm:$0xff]
      %v239 = vld [vmem:[%s1 + $0x80] sm:$0xff]
      %v240 = vld [vmem:[%s1 + $0x88] sm:$0xff]
      %v241 = vld [vmem:[%s1 + $0x90] sm:$0xff]
      %v242 = vld [vmem:[%s1 + $0x98] sm:$0xff]
      %v243 = vld [vmem:[%s1 + $0xa0] sm:$0xff]
      %v244 = vld [vmem:[%s1 + $0xa8] sm:$0xff]
      %v245 = vld [vmem:[%s1 + $0xb0] sm:$0xff]
      %v246 = vld [vmem:[%s1 + $0xb8] sm:$0xff]
      %v247 = vld [vmem:[%s2] sm:$0x1]
      %v249 = vperm.slane %v247, 0
      %v251 = vsel %vm220, %v217, 0
      %v253 = vsel %vm220, %v219, 0
      %255 = vmatpush.msra.mxu0 %v238
      %256 = vmatpush.msra.mxu0 %v237
      %257 = vmatpush.msra.mxu0 %v236
      %258 = vmatpush.msra.mxu0 %v235
      %259 = vmatpush.msra.mxu0 %v234
      %260 = vmatpush.msra.mxu0 %v233
      %261 = vmatpush.msra.mxu0 %v232
      %262 = vmatpush.msra.mxu0 %v231
      %263 = vmatpush.msra.mxu0 %v230
      %264 = vmatpush.msra.mxu0 %v229
      %265 = vmatpush.msra.mxu0 %v228
      %266 = vmatpush.msra.mxu0 %v227
      %267 = vmatpush.msra.mxu0 %v226
      %268 = vmatpush.msra.mxu0 %v225
      %269 = vmatpush.msra.mxu0 %v224
      %270 = vmatpush.msra.mxu0 %v223
      %271 = vmatmul.f32.gmra.mxu0 %v221
      %v272 = vpop.f32.mrf.mxu0
      %v273 = vadd.f32 %v249, %v272
      %274 = vmatmul.f32.gmra.mxu0 %v222
      %v275 = vpop.f32.mrf.mxu0
      %v276 = vadd.f32 %v249, %v275
      %277 = vdwg.mxu0
      %278 = vmatpush.msra.mxu0 0.0
      %279 = vmatpush.msra.mxu0 0.0
      %280 = vmatpush.msra.mxu0 0.0
      %281 = vmatpush.msra.mxu0 0.0
      %282 = vmatpush.msra.mxu0 0.0
      %283 = vmatpush.msra.mxu0 0.0
      %284 = vmatpush.msra.mxu0 0.0
      %285 = vmatpush.msra.mxu0 0.0
      %286 = vmatpush.msra.mxu0 %v246
      %287 = vmatpush.msra.mxu0 %v245
      %288 = vmatpush.msra.mxu0 %v244
      %289 = vmatpush.msra.mxu0 %v243
      %290 = vmatpush.msra.mxu0 %v242
      %291 = vmatpush.msra.mxu0 %v241
      %292 = vmatpush.msra.mxu0 %v240
      %293 = vmatpush.msra.mxu0 %v239
      %294 = vmatmul.f32.gmra.mxu0 %v251
      %v295 = vpop.f32.mrf.mxu0
      %v296 = vadd.f32 %v273, %v295
      %297 = vmatmul.f32.gmra.mxu0 %v253
      %v298 = vpop.f32.mrf.mxu0
      %v299 = vadd.f32 %v276, %v298
      %300 = vdwg.mxu0
      %301 = vst [vmem:[%s192] sm:$0xff] %v296
      %302 = vst [vmem:[%s192 + $0x8] sm:$0xff] %v299
      %s303 = smul.u32 2, %s19
      %p304 = scmp.lt.s32.totalorder %s18, 1
      %s305 = scalar_select %p304, %s18, 1
      %p306 = scmp.lt.s32.totalorder %s303, 1
      %s307 = scalar_select %p306, %s303, 1
      %s308 = smul.addr %s305, 2
      %s309 = sadd.s32 %s307, %s308
      %s310 = smul.addr %s309, 8
      %s311 = scalar_lea.vmem %s3, %s310
      // Predicated region
      $region33: #{dilate_conv_nchw.1} parent=31 // pred_check
        %p312 = pneg %p114
      $region34: #{dilate_conv_nchw.1} parent=31 // pred_check_branch
        %314 = sbr.rel (%p312) target = $region36
      $region35: #{dilate_conv_nchw.1} parent=31 // pred_region
        %s315 = smul.u32 2, %s19
      $region36: #{dilate_conv_nchw.1} parent=31 // pred_fallthru
        _
    $region32: #{dilate_conv_nchw.1} parent=5 // pred_fallthru
      _
    %p316 = scmp.le.s32.totalorder 2, %s9
    // Predicated region
    $region37: #{dilate_conv_nchw.1} parent=5 // pred_check
      %p317 = pneg %p316
    $region38: #{dilate_conv_nchw.1} parent=5 // pred_check_branch
      %319 = sbr.rel (%p317) target = $region40
    $region39: #{dilate_conv_nchw.1} parent=5 // pred_region
      %s320 = ssub.s32 %s9, 2
      // Predicated region
      $region41: #{dilate_conv_nchw.1} parent=39 // pred_check
        %p321 = pneg %p120
      $region42: #{dilate_conv_nchw.1} parent=39 // pred_check_branch
        %323 = sbr.rel (%p321) target = $region44
      $region43: #{dilate_conv_nchw.1} parent=39 // pred_region
        %s324 = smul.u32 2, %s21
        %p325 = scmp.lt.s32.totalorder %s20, 1
        %s326 = scalar_select %p325, %s20, 1
        %p327 = scmp.lt.s32.totalorder %s324, 1
        %s328 = scalar_select %p327, %s324, 1
        %s329 = smul.addr %s326, 2
        %s330 = sadd.s32 %s328, %s329
        %s331 = smul.addr %s330, 8
        %s332 = scalar_lea.vmem %s3, %s331
      $region44: #{dilate_conv_nchw.1} parent=39 // pred_fallthru
        _
    $region40: #{dilate_conv_nchw.1} parent=5 // pred_fallthru
      _
  $region6: #{dilate_conv_nchw.1} parent=0 // loop_footer
    %s13 = sadd.s32 1, %s9
  $region7: #{dilate_conv_nchw.1} parent=0 // loop_footer_branch
    %8 = sbr.rel target = $region3
  $region8: #{dilate_conv_nchw.1} parent=0 // loop_exit
    _

// kernel: dilate_conv_nchw.1
$region0: #{dilate_conv_nchw.1}
  #allocation0 [shape = 'u32[]', space=smem, size = 0x4, offset = 0x4, fixed_abs, tag = 'smem constant byte address 0x4 - core index']
  #allocation1 [shape = 'u32[72,128]{1,0:T(1,128)}', space=vmem, size = 0x9000, scoped, tag = 'internal scratch']
  %s0 = inlined_call_operand.vmem [shape: f32[2,20,64], index: 0, kind: input, shape index: {}]
  %s1 = inlined_call_operand.vmem [shape: f32[3,64,128], index: 1, kind: input, shape index: {}]
  %s2 = inlined_call_operand.vmem [shape: f32[1,128], index: 2, kind: input, shape index: {}]
  %s3 = inlined_call_operand.vmem [shape: f32[2,16,128], index: 3, kind: output, shape index: {}]
  %s4 = sld [smem:[#allocation0]]
  $region45: #{dilate_conv_nchw.1} parent=0
    _
  %s6 = ssub.s32 1, %s4
  %s7 = scalar_select 0, %s6, %s4
  loop: start=0, step=1, limit=4
  $region2: #{dilate_conv_nchw.1} parent=0 // loop_pre_header
    _
  $region3: #{dilate_conv_nchw.1} parent=0 // loop_header
    %s9 = sphi 0, %s13
    %p10 = scmp.ge.s32.totalorder %s9, 4
    %s16 = sphi 0, %s28
    %s17 = sphi 0, %s24
    %s18 = sphi 0, %s16
    %s19 = sphi 0, %s17
    %s20 = sphi 0, %s18
    %s21 = sphi 0, %s19
    %s31 = sphi 0, %s33
    %s34 = sphi 0, %s31
    %s35 = sphi 0, %s34
    %s51 = sphi 0, %s35
    %s55 = sphi 0, %s55
    %s57 = sphi 0, %s55
    %s58 = sphi 0, %s57
    %s72 = sphi 0, %s58
    %s76 = sphi 0, %s76
    %s78 = sphi 0, %s76
    %s79 = sphi 0, %s78
    %s93 = sphi 0, %s79
    %s101 = sphi 0, %s103
    %s104 = sphi 0, %s101
    %s105 = sphi 0, %s104
    %s121 = sphi 0, %s105
  $region4: #{dilate_conv_nchw.1} parent=0 // loop_header_branch
    %12 = sbr.rel (%p10) target = $region8
  $region5: #{dilate_conv_nchw.1} parent=0 // loop_body
    %s14 = ssub.s32 %s9, 1
    %s15 = ssub.s32 %s9, 2
    %s22 = sadd.s32 1, %s17
    %p23 = scmp.ge.s32.totalorder %s22, 1
    %s24 = scalar_select %p23, 0, %s22
    %s25 = sadd.s32 1, %s16
    %s26 = scalar_select %p23, %s25, %s16
    %p27 = scmp.ge.s32.totalorder %s26, 2
    %s28 = scalar_select %p27, 0, %s26
    %s29 = ssub.s32 %s16, %s28
    %p30 = scmp.eq.s32.totalorder %s29, 0
    %s32 = sadd.s32 %s31, 1
    %s33 = scalar_select %p30, %s31, %s32
    %p36 = pneg %p30
    %p37 = scmp.eq.s32.totalorder %s9, 1
    %p38 = por %p36, %p37
    %p39 = scmp.ne.s32.totalorder %s31, %s34
    %p40 = scmp.eq.s32.totalorder %s9, 0
    %p41 = por %p39, %p40
    %p42 = scmp.ne.s32.totalorder %s31, %s34
    %p43 = scmp.eq.s32.totalorder %s14, 1
    %p44 = por %p42, %p43
    %p45 = scmp.ne.s32.totalorder %s34, %s35
    %p46 = scmp.eq.s32.totalorder %s14, 0
    %p47 = por %p45, %p46
    %p48 = scmp.ne.s32.totalorder %s34, %s35
    %p49 = scmp.eq.s32.totalorder %s15, 1
    %p50 = por %p48, %p49
    %p52 = scmp.ne.s32.totalorder %s35, %s51
    %p53 = scmp.eq.s32.totalorder %s15, 0
    %p54 = por %p52, %p53
    %s56 = sadd.s32 %s55, 1
    %p59 = scmp.eq.s32.totalorder %s9, 1
    %p60 = scmp.ne.s32.totalorder %s55, %s57
    %p61 = scmp.eq.s32.totalorder %s9, 0
    %p62 = por %p60, %p61
    %p63 = scmp.ne.s32.totalorder %s55, %s57
    %p64 = scmp.eq.s32.totalorder %s14, 1
    %p65 = por %p63, %p64
    %p66 = scmp.ne.s32.totalorder %s57, %s58
    %p67 = scmp.eq.s32.totalorder %s14, 0
    %p68 = por %p66, %p67
    %p69 = scmp.ne.s32.totalorder %s57, %s58
    %p70 = scmp.eq.s32.totalorder %s15, 1
    %p71 = por %p69, %p70
    %p73 = scmp.ne.s32.totalorder %s58, %s72
    %p74 = scmp.eq.s32.totalorder %s15, 0
    %p75 = por %p73, %p74
    %s77 = sadd.s32 %s76, 1
    %p80 = scmp.eq.s32.totalorder %s9, 1
    %p81 = scmp.ne.s32.totalorder %s76, %s78
    %p82 = scmp.eq.s32.totalorder %s9, 0
    %p83 = por %p81, %p82
    %p84 = scmp.ne.s32.totalorder %s76, %s78
    %p85 = scmp.eq.s32.totalorder %s14, 1
    %p86 = por %p84, %p85
    %p87 = scmp.ne.s32.totalorder %s78, %s79
    %p88 = scmp.eq.s32.totalorder %s14, 0
    %p89 = por %p87, %p88
    %p90 = scmp.ne.s32.totalorder %s78, %s79
    %p91 = scmp.eq.s32.totalorder %s15, 1
    %p92 = por %p90, %p91
    %p94 = scmp.ne.s32.totalorder %s79, %s93
    %p95 = scmp.eq.s32.totalorder %s15, 0
    %p96 = por %p94, %p95
    %s97 = ssub.s32 %s16, %s28
    %s98 = ssub.s32 %s17, %s24
    %s99 = sor.u32 %s97, %s98
    %p100 = scmp.eq.s32.totalorder %s99, 0
    %s102 = sadd.s32 %s101, 1
    %s103 = scalar_select %p100, %s101, %s102
    %p106 = pneg %p100
    %p107 = scmp.eq.s32.totalorder %s9, 1
    %p108 = por %p106, %p107
    %p109 = scmp.ne.s32.totalorder %s101, %s104
    %p110 = scmp.eq.s32.totalorder %s9, 0
    %p111 = por %p109, %p110
    %p112 = scmp.ne.s32.totalorder %s101, %s104
    %p113 = scmp.eq.s32.totalorder %s14, 1
    %p114 = por %p112, %p113
    %p115 = scmp.ne.s32.totalorder %s104, %s105
    %p116 = scmp.eq.s32.totalorder %s14, 0
    %p117 = por %p115, %p116
    %p118 = scmp.ne.s32.totalorder %s104, %s105
    %p119 = scmp.eq.s32.totalorder %s15, 1
    %p120 = por %p118, %p119
    %p122 = scmp.ne.s32.totalorder %s105, %s121
    %p123 = scmp.eq.s32.totalorder %s15, 0
    %p124 = por %p122, %p123
    %p125 = scmp.le.s32.totalorder 1, %s9
    %p126 = scmp.lt.s32.totalorder %s9, 3
    %p127 = pnand %p125, %p126
    %p128 = pneg %p127
    // Predicated region
    $region9: #{dilate_conv_nchw.1} parent=5 // pred_check
      _
    $region10: #{dilate_conv_nchw.1} parent=5 // pred_check_branch
      %130 = sbr.rel (%p127) target = $region12
    $region11: #{dilate_conv_nchw.1} parent=5 // pred_region
      %s131 = ssub.s32 %s9, 1
      // Predicated region
      $region13: #{dilate_conv_nchw.1} parent=11 // pred_check
        %p132 = pneg %p68
      $region14: #{dilate_conv_nchw.1} parent=11 // pred_check_branch
        %134 = sbr.rel (%p132) target = $region16
      $region15: #{dilate_conv_nchw.1} parent=11 // pred_region
        _
      $region16: #{dilate_conv_nchw.1} parent=11 // pred_fallthru
        _
      // Predicated region
      $region17: #{dilate_conv_nchw.1} parent=11 // pred_check
        %p135 = pneg %p89
      $region18: #{dilate_conv_nchw.1} parent=11 // pred_check_branch
        %137 = sbr.rel (%p135) target = $region20
      $region19: #{dilate_conv_nchw.1} parent=11 // pred_region
        _
      $region20: #{dilate_conv_nchw.1} parent=11 // pred_fallthru
        _
    $region12: #{dilate_conv_nchw.1} parent=5 // pred_fallthru
      _
    %p138 = scmp.lt.s32.totalorder %s9, 2
    // Predicated region
    $region21: #{dilate_conv_nchw.1} parent=5 // pred_check
      %p139 = pneg %p138
    $region22: #{dilate_conv_nchw.1} parent=5 // pred_check_branch
      %141 = sbr.rel (%p139) target = $region24
    $region23: #{dilate_conv_nchw.1} parent=5 // pred_region
      // Predicated region
      $region25: #{dilate_conv_nchw.1} parent=23 // pred_check
        %p142 = pneg %p41
      $region26: #{dilate_conv_nchw.1} parent=23 // pred_check_branch
        %144 = sbr.rel (%p142) target = $region28
      $region27: #{dilate_conv_nchw.1} parent=23 // pred_region
        %p145 = scmp.lt.s32.totalorder %s16, 1
        %s146 = scalar_select %p145, %s16, 1
        %s147 = smul.addr %s146, 3
        %s148 = smul.addr %s147, 8
        %s149 = scalar_lea.vmem %s0, %s148
      $region28: #{dilate_conv_nchw.1} parent=23 // pred_fallthru
        _
    $region24: #{dilate_conv_nchw.1} parent=5 // pred_fallthru
      _
    %p150 = scmp.le.s32.totalorder 1, %s9
    %p151 = scmp.lt.s32.totalorder %s9, 3
    %p152 = pnand %p150, %p151
    %p153 = pneg %p152
    // Predicated region
    $region29: #{dilate_conv_nchw.1} parent=5 // pred_check
      _
    $region30: #{dilate_conv_nchw.1} parent=5 // pred_check_branch
      %155 = sbr.rel (%p152) target = $region32
    $region31: #{dilate_conv_nchw.1} parent=5 // pred_region
      %s156 = ssub.s32 %s9, 1
      %p157 = scmp.lt.s32.totalorder %s18, 1
      %s158 = scalar_select %p157, %s18, 1
      %s159 = smul.addr %s158, 3
      %s160 = smul.addr %s159, 8
      %s161 = scalar_lea.vmem %s0, %s160
      %p162 = pneg %p47
      %p163 = pneg %p44
      %p164 = pneg %p68
      %p165 = pneg %p65
      %p166 = pneg %p89
      %p167 = pneg %p86
      %p168 = pneg %p117
      %p169 = pneg %p114
      %s170 = smul.u32 2, %s19
      %p171 = scmp.lt.s32.totalorder %s18, 1
      %s172 = scalar_select %p171, %s18, 1
      %p173 = scmp.lt.s32.totalorder %s170, 1
      %s174 = scalar_select %p173, %s170, 1
      %s175 = smul.addr %s172, 2
      %s176 = sadd.s32 %s174, %s175
      %s177 = smul.addr %s176, 8
      %s178 = scalar_lea.vmem %s3, %s177
      %p179 = scmp.lt.s32.totalorder %s18, 1
      %s180 = scalar_select %p179, %s18, 1
      %s181 = smul.addr %s180, 3
      %s182 = smul.addr %s181, 8
      %s183 = scalar_lea.vmem %s0, %s182
      %s184 = smul.u32 2, %s19
      %p185 = scmp.lt.s32.totalorder %s18, 1
      %s186 = scalar_select %p185, %s18, 1
      %p187 = scmp.lt.s32.totalorder %s184, 1
      %s188 = scalar_select %p187, %s184, 1
      %s189 = smul.addr %s186, 2
      %s190 = sadd.s32 %s188, %s189
      %s191 = smul.addr %s190, 8
      %s192 = scalar_lea.vmem %s3, %s191
      %s193 = smul.u32 2, %s19
      %s194 = smul.u32 %s19, 16
      %s195 = scalar_lea.vmem %s183, %s194
      %v196 = vld [vmem:[%s195] sm:$0xff]
      %v197 = vld [vmem:[%s195 + $0x8] sm:$0xff]
      %v198 = vld [vmem:[%s195 + $0x10] sm:$0xf]
      %v199 = vld [vmem:[%s1] sm:$0xff]
      %v200 = vld [vmem:[%s1 + $0x8] sm:$0xff]
      %v201 = vld [vmem:[%s1 + $0x10] sm:$0xff]
      %v202 = vld [vmem:[%s1 + $0x18] sm:$0xff]
      %v203 = vld [vmem:[%s1 + $0x20] sm:$0xff]
      %v204 = vld [vmem:[%s1 + $0x28] sm:$0xff]
      %v205 = vld [vmem:[%s1 + $0x30] sm:$0xff]
      %v206 = vld [vmem:[%s1 + $0x38] sm:$0xff]
      %s207 = scalar_lea.vmem %s1, 64
      %v208 = vld [vmem:[%s207] sm:$0xff]
      %v209 = vld [vmem:[%s207 + $0x8] sm:$0xff]
      %v210 = vld [vmem:[%s207 + $0x10] sm:$0xff]
      %v211 = vld [vmem:[%s207 + $0x18] sm:$0xff]
      %v212 = vld [vmem:[%s207 + $0x20] sm:$0xff]
      %v213 = vld [vmem:[%s207 + $0x28] sm:$0xff]
      %v214 = vld [vmem:[%s207 + $0x30] sm:$0xff]
      %v215 = vld [vmem:[%s207 + $0x38] sm:$0xff]
      %vm219 = vcmask 1045504
      %v220 = vrot.slane %v196, 2
      %v221 = vrot.slane %v197, 2
      %v222 = vsel %vm219, %v220, %v221
      %v223 = vrot.slane %v198, 2
      %v224 = vsel %vm219, %v221, %v223
      %vm225 = vcmask 523264
      %v226 = vsel %vm225, %v222, 0
      %v228 = vsel %vm225, %v224, 0
      %230 = vmatpush.msra.mxu0 0.0
      %231 = vmatpush.msra.mxu0 0.0
      %232 = vmatpush.msra.mxu0 0.0
      %233 = vmatpush.msra.mxu0 0.0
      %234 = vmatpush.msra.mxu0 0.0
      %235 = vmatpush.msra.mxu0 0.0
      %236 = vmatpush.msra.mxu0 0.0
      %237 = vmatpush.msra.mxu0 0.0
      %238 = vmatpush.msra.mxu0 %v215
      %239 = vmatpush.msra.mxu0 %v214
      %240 = vmatpush.msra.mxu0 %v213
      %241 = vmatpush.msra.mxu0 %v212
      %242 = vmatpush.msra.mxu0 %v211
      %243 = vmatpush.msra.mxu0 %v210
      %244 = vmatpush.msra.mxu0 %v209
      %245 = vmatpush.msra.mxu0 %v208
      %246 = vmatmul.f32.gmra.mxu0 %v226
      %v247 = vpop.f32.mrf.mxu0
      %v248 = vadd.f32 0.0, %v247
      %249 = vmatmul.f32.gmra.mxu0 %v228
      %v250 = vpop.f32.mrf.mxu0
      %v251 = vadd.f32 0.0, %v250
      %252 = vdwg.mxu0
      %v253 = vsel %vm225, %v196, 0
      %v255 = vsel %vm225, %v197, 0
      %257 = vmatpush.msra.mxu0 0.0
      %258 = vmatpush.msra.mxu0 0.0
      %259 = vmatpush.msra.mxu0 0.0
      %260 = vmatpush.msra.mxu0 0.0
      %261 = vmatpush.msra.mxu0 0.0
      %262 = vmatpush.msra.mxu0 0.0
      %263 = vmatpush.msra.mxu0 0.0
      %264 = vmatpush.msra.mxu0 0.0
      %265 = vmatpush.msra.mxu0 %v206
      %266 = vmatpush.msra.mxu0 %v205
      %267 = vmatpush.msra.mxu0 %v204
      %268 = vmatpush.msra.mxu0 %v203
      %269 = vmatpush.msra.mxu0 %v202
      %270 = vmatpush.msra.mxu0 %v201
      %271 = vmatpush.msra.mxu0 %v200
      %272 = vmatpush.msra.mxu0 %v199
      %273 = vmatmul.f32.gmra.mxu0 %v253
      %v274 = vpop.f32.mrf.mxu0
      %v275 = vadd.f32 %v248, %v274
      %276 = vmatmul.f32.gmra.mxu0 %v255
      %v277 = vpop.f32.mrf.mxu0
      %v278 = vadd.f32 %v251, %v277
      %279 = vdwg.mxu0
      %s280 = scalar_lea.vmem %s1, 128
      %v281 = vld [vmem:[%s280] sm:$0xff]
      %v282 = vld [vmem:[%s280 + $0x8] sm:$0xff]
      %v283 = vld [vmem:[%s280 + $0x10] sm:$0xff]
      %v284 = vld [vmem:[%s280 + $0x18] sm:$0xff]
      %v285 = vld [vmem:[%s280 + $0x20] sm:$0xff]
      %v286 = vld [vmem:[%s280 + $0x28] sm:$0xff]
      %v287 = vld [vmem:[%s280 + $0x30] sm:$0xff]
      %v288 = vld [vmem:[%s280 + $0x38] sm:$0xff]
      %vm289 = vcmask 1043456
      %v290 = vrot.slane %v196, 4
      %v291 = vrot.slane %v197, 4
      %v292 = vsel %vm289, %v290, %v291
      %v293 = vrot.slane %v198, 4
      %v294 = vsel %vm289, %v291, %v293
      %v295 = vsel %vm225, %v292, 0
      %v297 = vsel %vm225, %v294, 0
      %299 = vmatpush.msra.mxu0 0.0
      %300 = vmatpush.msra.mxu0 0.0
      %301 = vmatpush.msra.mxu0 0.0
      %302 = vmatpush.msra.mxu0 0.0
      %303 = vmatpush.msra.mxu0 0.0
      %304 = vmatpush.msra.mxu0 0.0
      %305 = vmatpush.msra.mxu0 0.0
      %306 = vmatpush.msra.mxu0 0.0
      %307 = vmatpush.msra.mxu0 %v288
      %308 = vmatpush.msra.mxu0 %v287
      %309 = vmatpush.msra.mxu0 %v286
      %310 = vmatpush.msra.mxu0 %v285
      %311 = vmatpush.msra.mxu0 %v284
      %312 = vmatpush.msra.mxu0 %v283
      %313 = vmatpush.msra.mxu0 %v282
      %314 = vmatpush.msra.mxu0 %v281
      %315 = vmatmul.f32.gmra.mxu0 %v295
      %v316 = vpop.f32.mrf.mxu0
      %v317 = vadd.f32 0.0, %v316
      %318 = vmatmul.f32.gmra.mxu0 %v297
      %v319 = vpop.f32.mrf.mxu0
      %v320 = vadd.f32 0.0, %v319
      %321 = vdwg.mxu0
      %v322 = vadd.f32 %v275, %v317
      %v323 = vadd.f32 %v278, %v320
      %v324 = vld [vmem:[%s2] sm:$0x1]
      %v326 = vperm.slane %v324, 0
      %v328 = vadd.f32 %v322, %v326
      %v329 = vadd.f32 %v323, %v326
      %330 = vst [vmem:[%s192] sm:$0xff] %v328
      %331 = vst [vmem:[%s192 + $0x8] sm:$0xff] %v329
      %s332 = smul.u32 2, %s19
      %p333 = scmp.lt.s32.totalorder %s18, 1
      %s334 = scalar_select %p333, %s18, 1
      %p335 = scmp.lt.s32.totalorder %s332, 1
      %s336 = scalar_select %p335, %s332, 1
      %s337 = smul.addr %s334, 2
      %s338 = sadd.s32 %s336, %s337
      %s339 = smul.addr %s338, 8
      %s340 = scalar_lea.vmem %s3, %s339
      // Predicated region
      $region33: #{dilate_conv_nchw.1} parent=31 // pred_check
        %p341 = pneg %p114
      $region34: #{dilate_conv_nchw.1} parent=31 // pred_check_branch
        %343 = sbr.rel (%p341) target = $region36
      $region35: #{dilate_conv_nchw.1} parent=31 // pred_region
        %s344 = smul.u32 2, %s19
      $region36: #{dilate_conv_nchw.1} parent=31 // pred_fallthru
        _
    $region32: #{dilate_conv_nchw.1} parent=5 // pred_fallthru
      _
    %p345 = scmp.le.s32.totalorder 2, %s9
    // Predicated region
    $region37: #{dilate_conv_nchw.1} parent=5 // pred_check
      %p346 = pneg %p345
    $region38: #{dilate_conv_nchw.1} parent=5 // pred_check_branch
      %348 = sbr.rel (%p346) target = $region40
    $region39: #{dilate_conv_nchw.1} parent=5 // pred_region
      %s349 = ssub.s32 %s9, 2
      // Predicated region
      $region41: #{dilate_conv_nchw.1} parent=39 // pred_check
        %p350 = pneg %p120
      $region42: #{dilate_conv_nchw.1} parent=39 // pred_check_branch
        %352 = sbr.rel (%p350) target = $region44
      $region43: #{dilate_conv_nchw.1} parent=39 // pred_region
        %s353 = smul.u32 2, %s21
        %p354 = scmp.lt.s32.totalorder %s20, 1
        %s355 = scalar_select %p354, %s20, 1
        %p356 = scmp.lt.s32.totalorder %s353, 1
        %s357 = scalar_select %p356, %s353, 1
        %s358 = smul.addr %s355, 2
        %s359 = sadd.s32 %s357, %s358
        %s360 = smul.addr %s359, 8
        %s361 = scalar_lea.vmem %s3, %s360
      $region44: #{dilate_conv_nchw.1} parent=39 // pred_fallthru
        _
    $region40: #{dilate_conv_nchw.1} parent=5 // pred_fallthru
      _
  $region6: #{dilate_conv_nchw.1} parent=0 // loop_footer
    %s13 = sadd.s32 1, %s9
  $region7: #{dilate_conv_nchw.1} parent=0 // loop_footer_branch
    %8 = sbr.rel target = $region3
  $region8: #{dilate_conv_nchw.1} parent=0 // loop_exit
    _

</llo_original>
